<compile_context>
chip_gen: v7x
topology: tpu7x:2x2x1
jax: 0.10.0
libtpu: 0.0.40
codegen_flags: <defaults>
</compile_context>

<pallas_src>
import functools

import jax
import jax.numpy as jnp
from jax.experimental import pallas as pl
from jax.experimental.pallas import tpu as pltpu


def _cdiv(a, b):
    return (a + b - 1) // b


def _round_down(x, m):
    return (x // m) * m


def _curve_size_loss_kernel(params_ref, times_ref, out_ref, acc_ref, *,
                            tile, valid, apply_mask, exact_softplus):
    t_id = pl.program_id(1)                 # reduction axis (time tiles)
    n_t = pl.num_programs(1)

    @pl.when(t_id == 0)
    def _init():
        acc_ref[...] = jnp.zeros_like(acc_ref)

    times = times_ref[...].astype(jnp.float32)        # (B, tile) or (B, tile, 128)
    params = params_ref[...].astype(jnp.float32)      # (B, 3), resident in VMEM
    bshape = (params.shape[0],) + (1,) * (times.ndim - 1)
    alpha = params[:, 0:1].reshape(bshape)
    beta = params[:, 1:2].reshape(bshape)
    thresh = params[:, 2:3].reshape(bshape)

    x = jnp.sin(alpha * times + beta) - thresh

    if exact_softplus:
        # Exact PyTorch F.softplus (beta=1, threshold=20) for pathological thresh <= -19.
        sp = jnp.where(x > 20.0, x, jnp.log1p(jnp.exp(jnp.minimum(x, 20.0))))
    else:
        # x = sin(.) - thresh <= 1 - thresh < 20 whenever thresh > -19, so the linear
        # branch is dead and exp(x) cannot overflow.  (Forward-only loss.)
        sp = jnp.log1p(jnp.exp(x))

    if apply_mask:
        # Only the globally-last tile overruns the array; mask it there and nowhere else.
        p_id = pl.program_id(0)
        is_tail = jnp.logical_and(p_id == pl.num_programs(0) - 1, t_id == n_t - 1)

        @pl.when(is_tail)
        def _masked():
            g = p_id * n_t + t_id
            idx = g * tile + jax.lax.broadcasted_iota(jnp.int32, sp.shape, 1)
            acc_ref[...] += jnp.where(idx < valid, sp, 0.0)

        @pl.when(jnp.logical_not(is_tail))
        def _unmasked():
            acc_ref[...] += sp
    else:
        acc_ref[...] += sp

    @pl.when(t_id == n_t - 1)
    def _finalize():
        # Single cross-lane/sublane reduction per parallel part.
        out_ref[...] = jnp.sum(acc_ref[...]).reshape(1, 1, 1)


def _as_col(x, B):
    x = jnp.asarray(x, jnp.float32).reshape(-1, 1)
    return jnp.broadcast_to(x, (B, 1))


def _detect_n_par():
    # The 2-way split of the reduction only pays off on chips with two TensorCores (v7x);
    # on single-TC chips (v5e/v6e) it is just a serial outer loop with extra overhead.
    try:
        kind = jax.devices()[0].device_kind.lower()
        if "v7" in kind:
            return 2
    except Exception:  # pragma: no cover - defensive
        pass
    return 1


def curve_size_loss(src, times, smoother_stats, mask, *,
                    block_bytes=1 << 20, n_par=None, exact_softplus=False):
    """Pallas implementation of CurveSizeLoss.forward (mean=True).

    `times` may be f32 or bf16 (upcast in-kernel).  `block_bytes` is the per-block VMEM
    byte budget for the times input.  The simplified softplus assumes thresh > -19; pass
    exact_softplus=True otherwise.
    # TODO(synk): if profiling on v5e shows exposed DMA, add pipeline_mode=pl.Buffered(3)
    # on the times BlockSpec (small, last-resort win).
    """
    del src, mask  # unused, exactly as in the PyTorch module
    alpha, beta, thresh, _ = smoother_stats
    B, T = times.shape

    # Fuse the three per-sample parameters into one small (B, 3) resident VMEM block.
    params = jnp.concatenate(
        [_as_col(alpha, B), _as_col(beta, B), _as_col(thresh, B)], axis=1)

    # Layout: if T is lane-aligned, view times as (B, T//128, 128) so the sublane dim of
    # each vreg carries time, not batch (full VPU utilization when B < 8).
    if T % 128 == 0:
        times_view = times.reshape(B, T // 128, 128)
        unit, row_bytes = 8, 4 * B * 128
    else:
        times_view = times
        unit, row_bytes = 128, 4 * B

    axis1 = times_view.shape[1]

    # Tile the reduction axis by VMEM byte budget; single full-extent block if it fits.
    budget_rows = max(unit, _round_down(max(block_bytes // row_bytes, unit), unit))
    tile = axis1 if budget_rows >= axis1 else budget_rows
    n_tiles = _cdiv(axis1, tile)
    apply_mask = (n_tiles * tile != axis1)

    if n_par is None:
        n_par = _detect_n_par()
    if n_par != 1 and (n_tiles < 2 or n_tiles % n_par != 0):
        n_par = 1
    tiles_per_part = n_tiles // n_par

    is_3d = (times_view.ndim == 3)
    block = (B, tile, 128) if is_3d else (B, tile)
    if is_3d:
        times_spec = pl.BlockSpec(block, lambda p, t: (0, p * tiles_per_part + t, 0))
    else:
        times_spec = pl.BlockSpec(block, lambda p, t: (0, p * tiles_per_part + t))

    kernel = functools.partial(
        _curve_size_loss_kernel,
        tile=tile, valid=axis1, apply_mask=apply_mask,
        exact_softplus=exact_softplus)

    # VMEM: 2 pipelined times blocks + acc scratch (+ tiny params/out).  Only raise the
    # scoped limit for very large user-requested blocks, and stay under v7x's 64 MiB.
    block_bytes_actual = 4 * B * tile * (128 if is_3d else 1)
    vmem_est = 3 * block_bytes_actual + 4096
    cp_kwargs = dict(dimension_semantics=("parallel", "arbitrary"))
    if vmem_est > (12 << 20):
        cp_kwargs["vmem_limit_bytes"] = int(min(vmem_est + (4 << 20), 48 << 20))

    partials = pl.pallas_call(
        kernel,
        out_shape=jax.ShapeDtypeStruct((n_par, 1, 1), jnp.float32),
        grid_spec=pltpu.PrefetchScalarGridSpec(
            num_scalar_prefetch=0,
            grid=(n_par, tiles_per_part),
            in_specs=[
                pl.BlockSpec((B, 3), lambda p, t: (0, 0)),  # resident params
                times_spec,
            ],
            out_specs=pl.BlockSpec((1, 1, 1), lambda p, t: (p, 0, 0)),
            scratch_shapes=[pltpu.VMEM(block, jnp.float32)],
        ),
        compiler_params=pltpu.CompilerParams(**cp_kwargs),
    )(params, times_view)

    # Tiny final combine: sum of (at most 2) partials, then the mean.
    return jnp.sum(partials) * (1.0 / float(B * T))


def _reference(times, alpha, beta, thresh):
    x = jnp.sin(alpha * times.astype(jnp.float32) + beta) - thresh
    sp = jnp.where(x > 20.0, x, jnp.log1p(jnp.exp(jnp.minimum(x, 20.0))))
    return jnp.mean(sp)


if __name__ == "__main__":
    key = jax.random.PRNGKey(0)
    keys = jax.random.split(key, 12)

    def make_inputs(kt, ka, kb, kth, B, T):
        times = jax.random.uniform(kt, (B, T), dtype=jnp.float32) * 10.0
        alpha = 0.5 + jax.random.uniform(ka, (B, 1), dtype=jnp.float32)
        beta = jax.random.normal(kb, (B, 1), dtype=jnp.float32)
        thresh = 0.1 * jax.random.uniform(kth, (B, 1), dtype=jnp.float32)
        return times, alpha, beta, thresh

    def run(times, alpha, beta, thresh, src=None, mask=None, **kw):
        fn = jax.jit(functools.partial(curve_size_loss, **kw))
        out = fn(src, times, (alpha, beta, thresh, None), mask)
        return jax.block_until_ready(out)

    def check(name, out, times, alpha, beta, thresh):
        ref = _reference(times, alpha, beta, thresh)
        assert jnp.allclose(out, ref, rtol=1e-4, atol=1e-5), (name, out, ref)

    # 1) Lane-aligned T -> (B, S, 128) view, single block; src/mask present but unused.
    t1 = make_inputs(keys[0], keys[1], keys[2], keys[3], B=8, T=256)
    src = jax.random.normal(keys[4], (8, 256, 16), dtype=jnp.float32)
    msk = jnp.ones((8, 256), dtype=jnp.float32)
    check("aligned_single_block", run(*t1, src=src, mask=msk), *t1)

    # 2) Ragged T -> 2-D path, single full-extent block (no mask, no pad).
    t2 = make_inputs(keys[5], keys[1], keys[2], keys[3], B=4, T=300)
    check("ragged_single_block", run(*t2), *t2)

    # 2b) Same inputs through the exact-softplus variant.
    check("exact_softplus", run(*t2, exact_softplus=True), *t2)

    # 3) Small batch (B=2) exercising the sublane-packed (B, S, 128) layout.
    t3 = make_inputs(keys[6], keys[7], keys[8], keys[9], B=2, T=1024)
    check("small_batch_3d", run(*t3), *t3)

    # 4) Multi-tile 2-D path with a masked tail block (no padding copy).
    t4 = make_inputs(keys[10], keys[1], keys[2], keys[3], B=4, T=700)
    check("multi_tile_2d_tail", run(*t4, block_bytes=4096), *t4)

    # 5) Multi-tile 3-D path with a masked tail block.
    t5 = make_inputs(keys[11], keys[7], keys[8], keys[9], B=8, T=2176)
    check("multi_tile_3d_tail", run(*t5, block_bytes=32768), *t5)

    # 6) Forced 2-way parallel split (v7x code path; serial but correct on 1-TC chips).
    t6 = make_inputs(keys[5], keys[7], keys[2], keys[9], B=4, T=1000)
    check("parallel_split", run(*t6, block_bytes=2048, n_par=2), *t6)

    print("KERNEL_OK")
</pallas_src>

<mosaic_0001>
module attributes {stable_mosaic.version = 11 : i64} {
  func.func @_curve_size_loss_kernel(%arg0: i32, %arg1: i32, %arg2: memref<8x3xf32, #tpu.memory_space<vmem>>, %arg3: memref<8x2x128xf32, #tpu.memory_space<vmem>>, %arg4: memref<1x1x1xf32, #tpu.memory_space<vmem>>, %arg5: memref<8x2x128xf32, #tpu.memory_space<vmem>>) attributes {dimension_semantics = [#tpu.dimension_semantics<parallel>, #tpu.dimension_semantics<arbitrary>], iteration_bounds = array<i64: 1, 1>, scalar_prefetch = 0 : i64, scratch_operands = 1 : i64, tpu.core_type = #tpu.core_type<tc>, window_params = [{pipeline_mode = #tpu.pipeline_mode<synchronous>, transform_indices = @transform_0, window_bounds = array<i64: 8, 3>}, {transform_indices = @transform_1, window_bounds = array<i64: 8, 2, 128>}, {transform_indices = @transform_2, window_bounds = array<i64: 1, 1, 1>}]} {
    %c0_i32 = arith.constant 0 : i32
    %0 = arith.cmpi eq, %arg1, %c0_i32 : i32
    %1 = arith.extui %0 : i1 to i32
    %c0_i32_0 = arith.constant 0 : i32
    %2 = arith.cmpi ne, %1, %c0_i32_0 : i32
    scf.if %2 {
      %cst = arith.constant 0.000000e+00 : f32
      %26 = vector.broadcast %cst : f32 to vector<8x2x128xf32>
      %c0_13 = arith.constant 0 : index
      %c0_14 = arith.constant 0 : index
      %c0_15 = arith.constant 0 : index
      %27 = vector.load %arg5[%c0_13, %c0_14, %c0_15] : memref<8x2x128xf32, #tpu.memory_space<vmem>>, vector<8x2x128xf32>
      tpu.vector_store %arg5[%c0_13, %c0_14, %c0_15], %26 {strides = array<i32>} : memref<8x2x128xf32, #tpu.memory_space<vmem>>, vector<8x2x128xf32>,
    } else {
    }
    %c0 = arith.constant 0 : index
    %c0_1 = arith.constant 0 : index
    %c0_2 = arith.constant 0 : index
    %3 = vector.load %arg3[%c0, %c0_1, %c0_2] : memref<8x2x128xf32, #tpu.memory_space<vmem>>, vector<8x2x128xf32>
    %c0_3 = arith.constant 0 : index
    %c0_4 = arith.constant 0 : index
    %4 = vector.load %arg2[%c0_3, %c0_4] : memref<8x3xf32, #tpu.memory_space<vmem>>, vector<8x3xf32>
    %5 = vector.extract_strided_slice %4 {offsets = [0, 0], sizes = [8, 1], strides = [1, 1]} : vector<8x3xf32> to vector<8x1xf32>
    %6 = vector.shape_cast %5 : vector<8x1xf32> to vector<8x1x1xf32>
    %7 = vector.extract_strided_slice %4 {offsets = [0, 1], sizes = [8, 1], strides = [1, 1]} : vector<8x3xf32> to vector<8x1xf32>
    %8 = vector.shape_cast %7 : vector<8x1xf32> to vector<8x1x1xf32>
    %9 = vector.extract_strided_slice %4 {offsets = [0, 2], sizes = [8, 1], strides = [1, 1]} : vector<8x3xf32> to vector<8x1xf32>
    %10 = vector.shape_cast %9 : vector<8x1xf32> to vector<8x1x1xf32>
    %11 = vector.broadcast %6 : vector<8x1x1xf32> to vector<8x2x128xf32>
    %12 = arith.mulf %11, %3 : vector<8x2x128xf32>
    %13 = vector.broadcast %8 : vector<8x1x1xf32> to vector<8x2x128xf32>
    %14 = arith.addf %12, %13 : vector<8x2x128xf32>
    %15 = math.sin %14 : vector<8x2x128xf32>
    %16 = vector.broadcast %10 : vector<8x1x1xf32> to vector<8x2x128xf32>
    %17 = arith.subf %15, %16 : vector<8x2x128xf32>
    %18 = math.exp %17 : vector<8x2x128xf32>
    %19 = math.log1p %18 : vector<8x2x128xf32>
    %c0_5 = arith.constant 0 : index
    %c0_6 = arith.constant 0 : index
    %c0_7 = arith.constant 0 : index
    %20 = vector.load %arg5[%c0_5, %c0_6, %c0_7] : memref<8x2x128xf32, #tpu.memory_space<vmem>>, vector<8x2x128xf32>
    %21 = arith.addf %20, %19 : vector<8x2x128xf32>
    %c0_8 = arith.constant 0 : index
    %c0_9 = arith.constant 0 : index
    %c0_10 = arith.constant 0 : index
    %22 = vector.load %arg5[%c0_8, %c0_9, %c0_10] : memref<8x2x128xf32, #tpu.memory_space<vmem>>, vector<8x2x128xf32>
    tpu.vector_store %arg5[%c0_8, %c0_9, %c0_10], %21 {strides = array<i32>} : memref<8x2x128xf32, #tpu.memory_space<vmem>>, vector<8x2x128xf32>,
    %c0_i32_11 = arith.constant 0 : i32
    %23 = arith.cmpi eq, %arg1, %c0_i32_11 : i32
    %24 = arith.extui %23 : i1 to i32
    %c0_i32_12 = arith.constant 0 : i32
    %25 = arith.cmpi ne, %24, %c0_i32_12 : i32
    scf.if %25 {
      %c0_13 = arith.constant 0 : index
      %c0_14 = arith.constant 0 : index
      %c0_15 = arith.constant 0 : index
      %26 = vector.load %arg5[%c0_13, %c0_14, %c0_15] : memref<8x2x128xf32, #tpu.memory_space<vmem>>, vector<8x2x128xf32>
      %27 = vector.shape_cast %26 : vector<8x2x128xf32> to vector<1x8x2x128xf32>
      %cst = arith.constant dense<0.000000e+00> : vector<1xf32>
      %28 = vector.multi_reduction <add>, %27, %cst [1, 2, 3] : vector<1x8x2x128xf32> to vector<1xf32>
      %29 = vector.shape_cast %28 : vector<1xf32> to vector<1x1x1x1xf32>
      %30 = vector.extract %29[0, 0, 0, 0] : f32 from vector<1x1x1x1xf32>
      %31 = vector.broadcast %30 : f32 to vector<1x1x1xf32>
      %c0_16 = arith.constant 0 : index
      %c0_17 = arith.constant 0 : index
      %c0_18 = arith.constant 0 : index
      %32 = vector.load %arg4[%c0_16, %c0_17, %c0_18] : memref<1x1x1xf32, #tpu.memory_space<vmem>>, vector<1x1x1xf32>
      tpu.vector_store %arg4[%c0_16, %c0_17, %c0_18], %31 {strides = array<i32>} : memref<1x1x1xf32, #tpu.memory_space<vmem>>, vector<1x1x1xf32>,
    } else {
    }
    return
  }
  func.func @transform_0(%arg0: i32, %arg1: i32) -> (i32, i32) {
    %c0_i32 = arith.constant 0 : i32
    %c0_i32_0 = arith.constant 0 : i32
    %c0_i32_1 = arith.constant 0 : i32
    return %c0_i32, %c0_i32_0 : i32, i32
  }
  func.func @transform_1(%arg0: i32, %arg1: i32) -> (i32, i32, i32) {
    %c1_i32 = arith.constant 1 : i32
    %0 = arith.muli %arg0, %c1_i32 : i32
    %1 = arith.addi %0, %arg1 : i32
    %c0_i32 = arith.constant 0 : i32
    %c0_i32_0 = arith.constant 0 : i32
    %c0_i32_1 = arith.constant 0 : i32
    return %c0_i32, %1, %c0_i32_0 : i32, i32, i32
  }
  func.func @transform_2(%arg0: i32, %arg1: i32) -> (i32, i32, i32) {
    %c0_i32 = arith.constant 0 : i32
    %c0_i32_0 = arith.constant 0 : i32
    %c0_i32_1 = arith.constant 0 : i32
    return %arg0, %c0_i32, %c0_i32_0 : i32, i32, i32
  }
}

</mosaic_0001>

<llo_original>
// kernel: curve_size_loss.1
$region0: #{curve_size_loss.1}
  #allocation0 [shape = 'u32[]', space=smem, size = 0x4, offset = 0x4, fixed_abs, tag = 'smem constant byte address 0x4 - core index']
  #allocation1 [shape = 'u32[144,128]{1,0:T(1,128)}', space=vmem, size = 0x12000, scoped, tag = 'internal scratch']
  #allocation2 [shape = 'f32[8,2,128]{2,1,0:T(2,128)}', space=vmem, size = 0x2000, scoped, tag = 'scratch operand']
  %s0 = inlined_call_operand.vmem [shape: f32[8,3], index: 0, kind: input, shape index: {}]
  %s1 = inlined_call_operand.vmem [shape: f32[8,2,128], index: 1, kind: input, shape index: {}]
  %s2 = inlined_call_operand.hbm [shape: f32[1,1,1], index: 2, kind: output, shape index: {}]
  %s3 = sld [smem:[#allocation0]]
  $region26: #{curve_size_loss.1} parent=0
    _
  %s5 = ssub.s32 1, %s3
  %s6 = scalar_select 0, %s5, %s3
  $region1: #{curve_size_loss.1} parent=0
    #allocation3 [shape = 'u8[512]{0}', space=vmem, size = 0x400, scoped, tag = 'output window, operand 0, single buffered']
    #allocation4 [shape = 's32[1]{0}', space=sflag, size = 0x4, scoped, tag = 'scoped memory for curve_size_loss.1']
    %7 = vsyncpa [#allocation4], 0
    // Predicated region
    $region2: #{curve_size_loss.1} parent=1 // pred_check
      _
    $region3: #{curve_size_loss.1} parent=1 // pred_check_branch
      %9 = sbr.rel (0) target = $region5
    $region4: #{curve_size_loss.1} parent=1 // pred_region
      _
    $region5: #{curve_size_loss.1} parent=1 // pred_fallthru
      _
    // Predicated region
    $region6: #{curve_size_loss.1} parent=1 // pred_check
      _
    $region7: #{curve_size_loss.1} parent=1 // pred_check_branch
      %11 = sbr.rel (0) target = $region9
    $region8: #{curve_size_loss.1} parent=1 // pred_region
      %s12 = sadd.s32 0, 0
      %p13 = scmp.lt.s32.totalorder %s12, 0
      %s14 = scalar_select %p13, %s12, 0
      %s15 = smul.addr %s14, 2
      %s16 = scalar_lea.vmem %s1, %s15
      %s17 = sadd.s32 0, 0
    $region9: #{curve_size_loss.1} parent=1 // pred_fallthru
      _
    %s18 = sadd.s32 0, 0
    %p19 = scmp.lt.s32.totalorder %s18, 0
    %s20 = scalar_select %p19, %s18, 0
    %s21 = smul.addr %s20, 2
    %s22 = scalar_lea.vmem %s1, %s21
    %s23 = sadd.s32 0, 0
    %p24 = scmp.lt.s32.totalorder %s23, 0
    %s25 = scalar_select %p24, %s23, 0
    %s26 = smul.addr %s25, 2
    %s27 = scalar_lea.vmem %s1, %s26
    %s28 = sadd.s32 0, 0
    %p29 = scmp.eq.s32.totalorder 0, 0
    // Predicated region
    $region10: #{curve_size_loss.1} parent=1 // pred_check
      %p30 = pneg %p29
    $region11: #{curve_size_loss.1} parent=1 // pred_check_branch
      %32 = sbr.rel (%p30) target = $region13
    $region12: #{curve_size_loss.1} parent=1 // pred_region
      %33 = vst [vmem:[#allocation2] sm:$0x3] 0.0
      %34 = vst [vmem:[#allocation2 + $0x2] sm:$0x3] 0.0
      %35 = vst [vmem:[#allocation2 + $0x4] sm:$0x3] 0.0
      %36 = vst [vmem:[#allocation2 + $0x6] sm:$0x3] 0.0
      %37 = vst [vmem:[#allocation2 + $0x8] sm:$0x3] 0.0
      %38 = vst [vmem:[#allocation2 + $0xa] sm:$0x3] 0.0
      %39 = vst [vmem:[#allocation2 + $0xc] sm:$0x3] 0.0
      %40 = vst [vmem:[#allocation2 + $0xe] sm:$0x3] 0.0
    $region13: #{curve_size_loss.1} parent=1 // pred_fallthru
      _
    %v41 = vld [vmem:[%s27] sm:$0x3]
    %v42 = vld [vmem:[%s27 + $0x2] sm:$0x3]
    %v43 = vld [vmem:[%s27 + $0x4] sm:$0x3]
    %v44 = vld [vmem:[%s27 + $0x6] sm:$0x3]
    %v45 = vld [vmem:[%s27 + $0x8] sm:$0x3]
    %v46 = vld [vmem:[%s27 + $0xa] sm:$0x3]
    %v47 = vld [vmem:[%s27 + $0xc] sm:$0x3]
    %v48 = vld [vmem:[%s27 + $0xe] sm:$0x3]
    %v49 = vld [vmem:[%s0] sm:$0xff]
    %v51 = vcombine.high %v49, %v49
    %v53 = vunpack.c.l.s4 1966171168
    %v54 = vunpack.c.0.s8 %v53
    %v55 = vlaneseq
    %v56 = vshrl.u32 %v55, 7
    %v57 = vsub.s32 %v54, %v56
    %v58 = vrot.slane %v49, %v57
    %v60 = vunpack.c.l.s4 1966171168
    %v61 = vunpack.c.0.s8 %v60
    %v62 = vlaneseq
    %v63 = vshrl.u32 %v62, 7
    %v64 = vsub.s32 %v61, %v63
    %v65 = vrot.slane %v51, %v64
    %v66 = vcombine.high %v58, %v58
    %v67 = vcombine.high %v65, %v65
    %v69 = vunpack.c.l.s4 1966171168
    %v70 = vunpack.c.0.s8 %v69
    %v71 = vlaneseq
    %v72 = vshrl.u32 %v71, 7
    %v73 = vsub.s32 %v70, %v72
    %v74 = vrot.slane %v58, %v73
    %v76 = vunpack.c.l.s4 1966171168
    %v77 = vunpack.c.0.s8 %v76
    %v78 = vlaneseq
    %v79 = vshrl.u32 %v78, 7
    %v80 = vsub.s32 %v77, %v79
    %v81 = vrot.slane %v65, %v80
    %v83 = vunpack.c.l.s4 1966171168
    %v84 = vunpack.c.0.s8 %v83
    %v85 = vlaneseq
    %v86 = vshrl.u32 %v85, 7
    %v87 = vsub.s32 %v84, %v86
    %v88 = vrot.slane %v66, %v87
    %v90 = vunpack.c.l.s4 1966171168
    %v91 = vunpack.c.0.s8 %v90
    %v92 = vlaneseq
    %v93 = vshrl.u32 %v92, 7
    %v94 = vsub.s32 %v91, %v93
    %v95 = vrot.slane %v67, %v94
    %v96 = vcombine.high %v74, %v74
    %v97 = vcombine.high %v81, %v81
    %v98 = vcombine.high %v88, %v88
    %v99 = vcombine.high %v95, %v95
    %v100 = vlaneseq
    %v101 = vshrl.u32 %v100, 7
    %v102 = vsub.s32 0, %v101
    %v103 = vrot.slane %v74, %v102
    %v104 = vlaneseq
    %v105 = vshrl.u32 %v104, 7
    %v106 = vsub.s32 0, %v105
    %v107 = vrot.slane %v88, %v106
    %v108 = vlaneseq
    %v109 = vshrl.u32 %v108, 7
    %v110 = vsub.s32 0, %v109
    %v111 = vrot.slane %v96, %v110
    %v112 = vlaneseq
    %v113 = vshrl.u32 %v112, 7
    %v114 = vsub.s32 0, %v113
    %v115 = vrot.slane %v98, %v114
    %v116 = vlaneseq
    %v117 = vshrl.u32 %v116, 7
    %v118 = vsub.s32 0, %v117
    %v119 = vrot.slane %v81, %v118
    %v120 = vlaneseq
    %v121 = vshrl.u32 %v120, 7
    %v122 = vsub.s32 0, %v121
    %v123 = vrot.slane %v95, %v122
    %v124 = vlaneseq
    %v125 = vshrl.u32 %v124, 7
    %v126 = vsub.s32 0, %v125
    %v127 = vrot.slane %v97, %v126
    %v128 = vlaneseq
    %v129 = vshrl.u32 %v128, 7
    %v130 = vsub.s32 0, %v129
    %v131 = vrot.slane %v99, %v130
    %132 = vset.pattern.permute.xlu0 0
    %133 = vperm.xlu0 %132, %v103
    %v134 = vpop.permute.xlu0 %133
    %136 = vset.pattern.permute.xlu0 0
    %137 = vperm.xlu0 %136, %v107
    %v138 = vpop.permute.xlu0 %137
    %140 = vset.pattern.permute.xlu0 0
    %141 = vperm.xlu0 %140, %v111
    %v142 = vpop.permute.xlu0 %141
    %144 = vset.pattern.permute.xlu0 0
    %145 = vperm.xlu0 %144, %v115
    %v146 = vpop.permute.xlu0 %145
    %148 = vset.pattern.permute.xlu0 0
    %149 = vperm.xlu0 %148, %v119
    %v150 = vpop.permute.xlu0 %149
    %152 = vset.pattern.permute.xlu0 0
    %153 = vperm.xlu0 %152, %v123
    %v154 = vpop.permute.xlu0 %153
    %156 = vset.pattern.permute.xlu0 0
    %157 = vperm.xlu0 %156, %v127
    %v158 = vpop.permute.xlu0 %157
    %160 = vset.pattern.permute.xlu0 0
    %161 = vperm.xlu0 %160, %v131
    %v162 = vpop.permute.xlu0 %161
    %v164 = vmul.f32 %v134, %v41
    %v165 = vmul.f32 %v138, %v42
    %v166 = vmul.f32 %v142, %v43
    %v167 = vmul.f32 %v146, %v44
    %v168 = vmul.f32 %v150, %v45
    %v169 = vmul.f32 %v154, %v46
    %v170 = vmul.f32 %v158, %v47
    %v171 = vmul.f32 %v162, %v48
    %172 = vset.pattern.permute.xlu0 1
    %173 = vperm.xlu0 %172, %v103
    %v174 = vpop.permute.xlu0 %173
    %176 = vset.pattern.permute.xlu0 1
    %177 = vperm.xlu0 %176, %v107
    %v178 = vpop.permute.xlu0 %177
    %180 = vset.pattern.permute.xlu0 1
    %181 = vperm.xlu0 %180, %v111
    %v182 = vpop.permute.xlu0 %181
    %184 = vset.pattern.permute.xlu0 1
    %185 = vperm.xlu0 %184, %v115
    %v186 = vpop.permute.xlu0 %185
    %188 = vset.pattern.permute.xlu0 1
    %189 = vperm.xlu0 %188, %v119
    %v190 = vpop.permute.xlu0 %189
    %192 = vset.pattern.permute.xlu0 1
    %193 = vperm.xlu0 %192, %v123
    %v194 = vpop.permute.xlu0 %193
    %196 = vset.pattern.permute.xlu0 1
    %197 = vperm.xlu0 %196, %v127
    %v198 = vpop.permute.xlu0 %197
    %200 = vset.pattern.permute.xlu0 1
    %201 = vperm.xlu0 %200, %v131
    %v202 = vpop.permute.xlu0 %201
    %v204 = vadd.f32 %v164, %v174
    %v205 = vadd.f32 %v165, %v178
    %v206 = vadd.f32 %v166, %v182
    %v207 = vadd.f32 %v167, %v186
    %v208 = vadd.f32 %v168, %v190
    %v209 = vadd.f32 %v169, %v194
    %v210 = vadd.f32 %v170, %v198
    %v211 = vadd.f32 %v171, %v202
    %v212 = vand.u32 2147483647, %v204
    %vm213 = vcmp.le.f32.partialorder %v212, 0.7853982
    %vm214 = vcmp.lt.s32.totalorder %v204, 0
    %v215 = vand.u32 %v204, 2139095040
    %v216 = vshrl.u32 %v215, 23
    %v217 = vsub.s32 %v216, 127
    %v218 = vand.u32 2147483647, %v204
    %v219 = vand.u32 %v218, 8388607
    %v220 = vor.u32 %v219, 8388608
    %v221 = vsub.s32 0, %v220
    %v222 = vadd.s32 %v217, 1
    %vm223 = vcmp.gt.s32.totalorder %v222, 0
    %v224 = vsel %vm223, %v222, 0
    %v225 = vshrl.u32 %v224, 5
    %v226 = vand.u32 %v224, 31
    %v227 = vsub.s32 32, %v226
    %v228 = vshrl.u32 683565275, %v227
    %v229 = vshll.u32 683565275, %v226
    %v230 = vshrl.u32 2475754826, %v227
    %v231 = vor.u32 %v229, %v230
    %v232 = vshll.u32 2475754826, %v226
    %v233 = vshrl.u32 2131351028, %v227
    %v234 = vor.u32 %v232, %v233
    %v235 = vshll.u32 2131351028, %v226
    %v236 = vshrl.u32 2102212464, %v227
    %v237 = vor.u32 %v235, %v236
    %v238 = vshll.u32 2102212464, %v226
    %v239 = vshrl.u32 920167782, %v227
    %v240 = vor.u32 %v238, %v239
    %v241 = vshll.u32 920167782, %v226
    %v242 = vshrl.u32 1326507024, %v227
    %v243 = vor.u32 %v241, %v242
    %vm244 = vcmp.lt.s32.totalorder %v225, 1
    %vm245 = vcmp.lt.s32.totalorder %v225, 2
    %vm246 = vcmp.lt.s32.totalorder %v225, 3
    %vm247 = vcmp.lt.s32.totalorder %v225, 4
    %v248 = vsel %vm244, %v228, %v231
    %v249 = vsel %vm247, %v237, 2102212464
    %v250 = vsel %vm246, %v234, %v249
    %v251 = vsel %vm245, %v248, %v250
    %v252 = vsel %vm244, %v231, %v234
    %v253 = vsel %vm247, %v240, 920167782
    %v254 = vsel %vm246, %v237, %v253
    %v255 = vsel %vm245, %v252, %v254
    %v256 = vsel %vm244, %v234, %v237
    %v257 = vsel %vm247, %v243, 1326507024
    %v258 = vsel %vm246, %v240, %v257
    %v259 = vsel %vm245, %v256, %v258
    %v260 = vshll.u32 %v220, 8
    %v261 = vmul.u32.u64.compose %v260, %v259
    %v262 = vextract.low.u32 %v261
    %v263 = vextract.high.u32 %v261
    %v264 = vmul.u32.u64.compose %v260, %v255
    %v265 = vextract.low.u32 %v264
    %v266 = vextract.high.u32 %v264
    %v267 = vmul.u32 %v260, %v251
    %v268 = vadd.s32 %v263, %v265
    %vm269 = vc.u32 %v263, %v265
    %v270 = vadd.s32 %v266, 1
    %v271 = vsel %vm269, %v270, %v266
    %v272 = vadd.s32 %v267, %v271
    %v273 = vadd.s32 %v272, 536870912
    %v274 = vshrl.u32 %v273, 30
    %v275 = vshll.u32 %v274, 30
    %v276 = vsub.s32 %v272, %v275
    %vm277 = vcmp.lt.s32.totalorder %v276, 0
    %v278 = vsub.s32 0, %v276
    %v279 = vsel %vm277, %v278, %v276
    %v280 = vclz %v279
    %v281 = vsub.s32 %v280, 2
    %vm282 = vcmp.gt.s32.totalorder 0, %v281
    %v283 = vsel %vm282, 0, %v281
    %v284 = vsub.s32 32, %v283
    %v285 = vshll.u32 %v276, %v283
    %v286 = vshrl.u32 %v268, %v284
    %v287 = vor.u32 %v285, %v286
    %v288 = vsub.s32 4294967266, %v283
    %v289 = vadd.s32 %v288, 127
    %v290 = vshll.u32 %v289, 23
    %v291 = vor.u32 4788187, %v290
    %v292 = vand.u32 2147483647, %v291
    %v294 = vcvt.s32.f32 %v287
    %v295 = vmul.f32 %v294, %v292
    %v296 = vxor.u32 %v295, 2147483648
    %v297 = vsel %vm214, %v296, %v295
    %v298 = vsub.s32 4, %v274
    %v299 = vsel %vm214, %v298, %v274
    %v300 = vsel %vm213, %v204, %v297
    %v301 = vsel %vm213, 0, %v299
    %v302 = vcosq.f32.pop %v300
    %v303 = vsinq.f32.pop %v300
    %vm304 = vweird.f32 %v204
    %v305 = vadd.s32 %v301, 3
    %v306 = vand.u32 %v305, 3
    %vm307 = vcmp.lt.s32.totalorder %v306, 2
    %vm308 = vcmp.eq.s32.totalorder %v306, 0
    %v309 = vxor.u32 %v303, 2147483648
    %v310 = vsel %vm308, %v302, %v309
    %vm311 = vcmp.eq.s32.totalorder %v306, 2
    %v312 = vxor.u32 %v302, 2147483648
    %v313 = vsel %vm311, %v312, %v303
    %v314 = vsel %vm307, %v310, %v313
    %v315 = vsel %vm304, nan, %v314
    %v316 = vand.u32 2147483647, %v205
    %vm317 = vcmp.le.f32.partialorder %v316, 0.7853982
    %vm318 = vcmp.lt.s32.totalorder %v205, 0
    %v319 = vand.u32 %v205, 2139095040
    %v320 = vshrl.u32 %v319, 23
    %v321 = vsub.s32 %v320, 127
    %v322 = vand.u32 2147483647, %v205
    %v323 = vand.u32 %v322, 8388607
    %v324 = vor.u32 %v323, 8388608
    %v325 = vsub.s32 0, %v324
    %v326 = vadd.s32 %v321, 1
    %vm327 = vcmp.gt.s32.totalorder %v326, 0
    %v328 = vsel %vm327, %v326, 0
    %v329 = vshrl.u32 %v328, 5
    %v330 = vand.u32 %v328, 31
    %v331 = vsub.s32 32, %v330
    %v332 = vshrl.u32 683565275, %v331
    %v333 = vshll.u32 683565275, %v330
    %v334 = vshrl.u32 2475754826, %v331
    %v335 = vor.u32 %v333, %v334
    %v336 = vshll.u32 2475754826, %v330
    %v337 = vshrl.u32 2131351028, %v331
    %v338 = vor.u32 %v336, %v337
    %v339 = vshll.u32 2131351028, %v330
    %v340 = vshrl.u32 2102212464, %v331
    %v341 = vor.u32 %v339, %v340
    %v342 = vshll.u32 2102212464, %v330
    %v343 = vshrl.u32 920167782, %v331
    %v344 = vor.u32 %v342, %v343
    %v345 = vshll.u32 920167782, %v330
    %v346 = vshrl.u32 1326507024, %v331
    %v347 = vor.u32 %v345, %v346
    %vm348 = vcmp.lt.s32.totalorder %v329, 1
    %vm349 = vcmp.lt.s32.totalorder %v329, 2
    %vm350 = vcmp.lt.s32.totalorder %v329, 3
    %vm351 = vcmp.lt.s32.totalorder %v329, 4
    %v352 = vsel %vm348, %v332, %v335
    %v353 = vsel %vm351, %v341, 2102212464
    %v354 = vsel %vm350, %v338, %v353
    %v355 = vsel %vm349, %v352, %v354
    %v356 = vsel %vm348, %v335, %v338
    %v357 = vsel %vm351, %v344, 920167782
    %v358 = vsel %vm350, %v341, %v357
    %v359 = vsel %vm349, %v356, %v358
    %v360 = vsel %vm348, %v338, %v341
    %v361 = vsel %vm351, %v347, 1326507024
    %v362 = vsel %vm350, %v344, %v361
    %v363 = vsel %vm349, %v360, %v362
    %v364 = vshll.u32 %v324, 8
    %v365 = vmul.u32.u64.compose %v364, %v363
    %v366 = vextract.low.u32 %v365
    %v367 = vextract.high.u32 %v365
    %v368 = vmul.u32.u64.compose %v364, %v359
    %v369 = vextract.low.u32 %v368
    %v370 = vextract.high.u32 %v368
    %v371 = vmul.u32 %v364, %v355
    %v372 = vadd.s32 %v367, %v369
    %vm373 = vc.u32 %v367, %v369
    %v374 = vadd.s32 %v370, 1
    %v375 = vsel %vm373, %v374, %v370
    %v376 = vadd.s32 %v371, %v375
    %v377 = vadd.s32 %v376, 536870912
    %v378 = vshrl.u32 %v377, 30
    %v379 = vshll.u32 %v378, 30
    %v380 = vsub.s32 %v376, %v379
    %vm381 = vcmp.lt.s32.totalorder %v380, 0
    %v382 = vsub.s32 0, %v380
    %v383 = vsel %vm381, %v382, %v380
    %v384 = vclz %v383
    %v385 = vsub.s32 %v384, 2
    %vm386 = vcmp.gt.s32.totalorder 0, %v385
    %v387 = vsel %vm386, 0, %v385
    %v388 = vsub.s32 32, %v387
    %v389 = vshll.u32 %v380, %v387
    %v390 = vshrl.u32 %v372, %v388
    %v391 = vor.u32 %v389, %v390
    %v392 = vsub.s32 4294967266, %v387
    %v393 = vadd.s32 %v392, 127
    %v394 = vshll.u32 %v393, 23
    %v395 = vor.u32 4788187, %v394
    %v396 = vand.u32 2147483647, %v395
    %v398 = vcvt.s32.f32 %v391
    %v399 = vmul.f32 %v398, %v396
    %v400 = vxor.u32 %v399, 2147483648
    %v401 = vsel %vm318, %v400, %v399
    %v402 = vsub.s32 4, %v378
    %v403 = vsel %vm318, %v402, %v378
    %v404 = vsel %vm317, %v205, %v401
    %v405 = vsel %vm317, 0, %v403
    %v406 = vcosq.f32.pop %v404
    %v407 = vsinq.f32.pop %v404
    %vm408 = vweird.f32 %v205
    %v409 = vadd.s32 %v405, 3
    %v410 = vand.u32 %v409, 3
    %vm411 = vcmp.lt.s32.totalorder %v410, 2
    %vm412 = vcmp.eq.s32.totalorder %v410, 0
    %v413 = vxor.u32 %v407, 2147483648
    %v414 = vsel %vm412, %v406, %v413
    %vm415 = vcmp.eq.s32.totalorder %v410, 2
    %v416 = vxor.u32 %v406, 2147483648
    %v417 = vsel %vm415, %v416, %v407
    %v418 = vsel %vm411, %v414, %v417
    %v419 = vsel %vm408, nan, %v418
    %v420 = vand.u32 2147483647, %v206
    %vm421 = vcmp.le.f32.partialorder %v420, 0.7853982
    %vm422 = vcmp.lt.s32.totalorder %v206, 0
    %v423 = vand.u32 %v206, 2139095040
    %v424 = vshrl.u32 %v423, 23
    %v425 = vsub.s32 %v424, 127
    %v426 = vand.u32 2147483647, %v206
    %v427 = vand.u32 %v426, 8388607
    %v428 = vor.u32 %v427, 8388608
    %v429 = vsub.s32 0, %v428
    %v430 = vadd.s32 %v425, 1
    %vm431 = vcmp.gt.s32.totalorder %v430, 0
    %v432 = vsel %vm431, %v430, 0
    %v433 = vshrl.u32 %v432, 5
    %v434 = vand.u32 %v432, 31
    %v435 = vsub.s32 32, %v434
    %v436 = vshrl.u32 683565275, %v435
    %v437 = vshll.u32 683565275, %v434
    %v438 = vshrl.u32 2475754826, %v435
    %v439 = vor.u32 %v437, %v438
    %v440 = vshll.u32 2475754826, %v434
    %v441 = vshrl.u32 2131351028, %v435
    %v442 = vor.u32 %v440, %v441
    %v443 = vshll.u32 2131351028, %v434
    %v444 = vshrl.u32 2102212464, %v435
    %v445 = vor.u32 %v443, %v444
    %v446 = vshll.u32 2102212464, %v434
    %v447 = vshrl.u32 920167782, %v435
    %v448 = vor.u32 %v446, %v447
    %v449 = vshll.u32 920167782, %v434
    %v450 = vshrl.u32 1326507024, %v435
    %v451 = vor.u32 %v449, %v450
    %vm452 = vcmp.lt.s32.totalorder %v433, 1
    %vm453 = vcmp.lt.s32.totalorder %v433, 2
    %vm454 = vcmp.lt.s32.totalorder %v433, 3
    %vm455 = vcmp.lt.s32.totalorder %v433, 4
    %v456 = vsel %vm452, %v436, %v439
    %v457 = vsel %vm455, %v445, 2102212464
    %v458 = vsel %vm454, %v442, %v457
    %v459 = vsel %vm453, %v456, %v458
    %v460 = vsel %vm452, %v439, %v442
    %v461 = vsel %vm455, %v448, 920167782
    %v462 = vsel %vm454, %v445, %v461
    %v463 = vsel %vm453, %v460, %v462
    %v464 = vsel %vm452, %v442, %v445
    %v465 = vsel %vm455, %v451, 1326507024
    %v466 = vsel %vm454, %v448, %v465
    %v467 = vsel %vm453, %v464, %v466
    %v468 = vshll.u32 %v428, 8
    %v469 = vmul.u32.u64.compose %v468, %v467
    %v470 = vextract.low.u32 %v469
    %v471 = vextract.high.u32 %v469
    %v472 = vmul.u32.u64.compose %v468, %v463
    %v473 = vextract.low.u32 %v472
    %v474 = vextract.high.u32 %v472
    %v475 = vmul.u32 %v468, %v459
    %v476 = vadd.s32 %v471, %v473
    %vm477 = vc.u32 %v471, %v473
    %v478 = vadd.s32 %v474, 1
    %v479 = vsel %vm477, %v478, %v474
    %v480 = vadd.s32 %v475, %v479
    %v481 = vadd.s32 %v480, 536870912
    %v482 = vshrl.u32 %v481, 30
    %v483 = vshll.u32 %v482, 30
    %v484 = vsub.s32 %v480, %v483
    %vm485 = vcmp.lt.s32.totalorder %v484, 0
    %v486 = vsub.s32 0, %v484
    %v487 = vsel %vm485, %v486, %v484
    %v488 = vclz %v487
    %v489 = vsub.s32 %v488, 2
    %vm490 = vcmp.gt.s32.totalorder 0, %v489
    %v491 = vsel %vm490, 0, %v489
    %v492 = vsub.s32 32, %v491
    %v493 = vshll.u32 %v484, %v491
    %v494 = vshrl.u32 %v476, %v492
    %v495 = vor.u32 %v493, %v494
    %v496 = vsub.s32 4294967266, %v491
    %v497 = vadd.s32 %v496, 127
    %v498 = vshll.u32 %v497, 23
    %v499 = vor.u32 4788187, %v498
    %v500 = vand.u32 2147483647, %v499
    %v502 = vcvt.s32.f32 %v495
    %v503 = vmul.f32 %v502, %v500
    %v504 = vxor.u32 %v503, 2147483648
    %v505 = vsel %vm422, %v504, %v503
    %v506 = vsub.s32 4, %v482
    %v507 = vsel %vm422, %v506, %v482
    %v508 = vsel %vm421, %v206, %v505
    %v509 = vsel %vm421, 0, %v507
    %v510 = vcosq.f32.pop %v508
    %v511 = vsinq.f32.pop %v508
    %vm512 = vweird.f32 %v206
    %v513 = vadd.s32 %v509, 3
    %v514 = vand.u32 %v513, 3
    %vm515 = vcmp.lt.s32.totalorder %v514, 2
    %vm516 = vcmp.eq.s32.totalorder %v514, 0
    %v517 = vxor.u32 %v511, 2147483648
    %v518 = vsel %vm516, %v510, %v517
    %vm519 = vcmp.eq.s32.totalorder %v514, 2
    %v520 = vxor.u32 %v510, 2147483648
    %v521 = vsel %vm519, %v520, %v511
    %v522 = vsel %vm515, %v518, %v521
    %v523 = vsel %vm512, nan, %v522
    %v524 = vand.u32 2147483647, %v207
    %vm525 = vcmp.le.f32.partialorder %v524, 0.7853982
    %vm526 = vcmp.lt.s32.totalorder %v207, 0
    %v527 = vand.u32 %v207, 2139095040
    %v528 = vshrl.u32 %v527, 23
    %v529 = vsub.s32 %v528, 127
    %v530 = vand.u32 2147483647, %v207
    %v531 = vand.u32 %v530, 8388607
    %v532 = vor.u32 %v531, 8388608
    %v533 = vsub.s32 0, %v532
    %v534 = vadd.s32 %v529, 1
    %vm535 = vcmp.gt.s32.totalorder %v534, 0
    %v536 = vsel %vm535, %v534, 0
    %v537 = vshrl.u32 %v536, 5
    %v538 = vand.u32 %v536, 31
    %v539 = vsub.s32 32, %v538
    %v540 = vshrl.u32 683565275, %v539
    %v541 = vshll.u32 683565275, %v538
    %v542 = vshrl.u32 2475754826, %v539
    %v543 = vor.u32 %v541, %v542
    %v544 = vshll.u32 2475754826, %v538
    %v545 = vshrl.u32 2131351028, %v539
    %v546 = vor.u32 %v544, %v545
    %v547 = vshll.u32 2131351028, %v538
    %v548 = vshrl.u32 2102212464, %v539
    %v549 = vor.u32 %v547, %v548
    %v550 = vshll.u32 2102212464, %v538
    %v551 = vshrl.u32 920167782, %v539
    %v552 = vor.u32 %v550, %v551
    %v553 = vshll.u32 920167782, %v538
    %v554 = vshrl.u32 1326507024, %v539
    %v555 = vor.u32 %v553, %v554
    %vm556 = vcmp.lt.s32.totalorder %v537, 1
    %vm557 = vcmp.lt.s32.totalorder %v537, 2
    %vm558 = vcmp.lt.s32.totalorder %v537, 3
    %vm559 = vcmp.lt.s32.totalorder %v537, 4
    %v560 = vsel %vm556, %v540, %v543
    %v561 = vsel %vm559, %v549, 2102212464
    %v562 = vsel %vm558, %v546, %v561
    %v563 = vsel %vm557, %v560, %v562
    %v564 = vsel %vm556, %v543, %v546
    %v565 = vsel %vm559, %v552, 920167782
    %v566 = vsel %vm558, %v549, %v565
    %v567 = vsel %vm557, %v564, %v566
    %v568 = vsel %vm556, %v546, %v549
    %v569 = vsel %vm559, %v555, 1326507024
    %v570 = vsel %vm558, %v552, %v569
    %v571 = vsel %vm557, %v568, %v570
    %v572 = vshll.u32 %v532, 8
    %v573 = vmul.u32.u64.compose %v572, %v571
    %v574 = vextract.low.u32 %v573
    %v575 = vextract.high.u32 %v573
    %v576 = vmul.u32.u64.compose %v572, %v567
    %v577 = vextract.low.u32 %v576
    %v578 = vextract.high.u32 %v576
    %v579 = vmul.u32 %v572, %v563
    %v580 = vadd.s32 %v575, %v577
    %vm581 = vc.u32 %v575, %v577
    %v582 = vadd.s32 %v578, 1
    %v583 = vsel %vm581, %v582, %v578
    %v584 = vadd.s32 %v579, %v583
    %v585 = vadd.s32 %v584, 536870912
    %v586 = vshrl.u32 %v585, 30
    %v587 = vshll.u32 %v586, 30
    %v588 = vsub.s32 %v584, %v587
    %vm589 = vcmp.lt.s32.totalorder %v588, 0
    %v590 = vsub.s32 0, %v588
    %v591 = vsel %vm589, %v590, %v588
    %v592 = vclz %v591
    %v593 = vsub.s32 %v592, 2
    %vm594 = vcmp.gt.s32.totalorder 0, %v593
    %v595 = vsel %vm594, 0, %v593
    %v596 = vsub.s32 32, %v595
    %v597 = vshll.u32 %v588, %v595
    %v598 = vshrl.u32 %v580, %v596
    %v599 = vor.u32 %v597, %v598
    %v600 = vsub.s32 4294967266, %v595
    %v601 = vadd.s32 %v600, 127
    %v602 = vshll.u32 %v601, 23
    %v603 = vor.u32 4788187, %v602
    %v604 = vand.u32 2147483647, %v603
    %v606 = vcvt.s32.f32 %v599
    %v607 = vmul.f32 %v606, %v604
    %v608 = vxor.u32 %v607, 2147483648
    %v609 = vsel %vm526, %v608, %v607
    %v610 = vsub.s32 4, %v586
    %v611 = vsel %vm526, %v610, %v586
    %v612 = vsel %vm525, %v207, %v609
    %v613 = vsel %vm525, 0, %v611
    %v614 = vcosq.f32.pop %v612
    %v615 = vsinq.f32.pop %v612
    %vm616 = vweird.f32 %v207
    %v617 = vadd.s32 %v613, 3
    %v618 = vand.u32 %v617, 3
    %vm619 = vcmp.lt.s32.totalorder %v618, 2
    %vm620 = vcmp.eq.s32.totalorder %v618, 0
    %v621 = vxor.u32 %v615, 2147483648
    %v622 = vsel %vm620, %v614, %v621
    %vm623 = vcmp.eq.s32.totalorder %v618, 2
    %v624 = vxor.u32 %v614, 2147483648
    %v625 = vsel %vm623, %v624, %v615
    %v626 = vsel %vm619, %v622, %v625
    %v627 = vsel %vm616, nan, %v626
    %v628 = vand.u32 2147483647, %v208
    %vm629 = vcmp.le.f32.partialorder %v628, 0.7853982
    %vm630 = vcmp.lt.s32.totalorder %v208, 0
    %v631 = vand.u32 %v208, 2139095040
    %v632 = vshrl.u32 %v631, 23
    %v633 = vsub.s32 %v632, 127
    %v634 = vand.u32 2147483647, %v208
    %v635 = vand.u32 %v634, 8388607
    %v636 = vor.u32 %v635, 8388608
    %v637 = vsub.s32 0, %v636
    %v638 = vadd.s32 %v633, 1
    %vm639 = vcmp.gt.s32.totalorder %v638, 0
    %v640 = vsel %vm639, %v638, 0
    %v641 = vshrl.u32 %v640, 5
    %v642 = vand.u32 %v640, 31
    %v643 = vsub.s32 32, %v642
    %v644 = vshrl.u32 683565275, %v643
    %v645 = vshll.u32 683565275, %v642
    %v646 = vshrl.u32 2475754826, %v643
    %v647 = vor.u32 %v645, %v646
    %v648 = vshll.u32 2475754826, %v642
    %v649 = vshrl.u32 2131351028, %v643
    %v650 = vor.u32 %v648, %v649
    %v651 = vshll.u32 2131351028, %v642
    %v652 = vshrl.u32 2102212464, %v643
    %v653 = vor.u32 %v651, %v652
    %v654 = vshll.u32 2102212464, %v642
    %v655 = vshrl.u32 920167782, %v643
    %v656 = vor.u32 %v654, %v655
    %v657 = vshll.u32 920167782, %v642
    %v658 = vshrl.u32 1326507024, %v643
    %v659 = vor.u32 %v657, %v658
    %vm660 = vcmp.lt.s32.totalorder %v641, 1
    %vm661 = vcmp.lt.s32.totalorder %v641, 2
    %vm662 = vcmp.lt.s32.totalorder %v641, 3
    %vm663 = vcmp.lt.s32.totalorder %v641, 4
    %v664 = vsel %vm660, %v644, %v647
    %v665 = vsel %vm663, %v653, 2102212464
    %v666 = vsel %vm662, %v650, %v665
    %v667 = vsel %vm661, %v664, %v666
    %v668 = vsel %vm660, %v647, %v650
    %v669 = vsel %vm663, %v656, 920167782
    %v670 = vsel %vm662, %v653, %v669
    %v671 = vsel %vm661, %v668, %v670
    %v672 = vsel %vm660, %v650, %v653
    %v673 = vsel %vm663, %v659, 1326507024
    %v674 = vsel %vm662, %v656, %v673
    %v675 = vsel %vm661, %v672, %v674
    %v676 = vshll.u32 %v636, 8
    %v677 = vmul.u32.u64.compose %v676, %v675
    %v678 = vextract.low.u32 %v677
    %v679 = vextract.high.u32 %v677
    %v680 = vmul.u32.u64.compose %v676, %v671
    %v681 = vextract.low.u32 %v680
    %v682 = vextract.high.u32 %v680
    %v683 = vmul.u32 %v676, %v667
    %v684 = vadd.s32 %v679, %v681
    %vm685 = vc.u32 %v679, %v681
    %v686 = vadd.s32 %v682, 1
    %v687 = vsel %vm685, %v686, %v682
    %v688 = vadd.s32 %v683, %v687
    %v689 = vadd.s32 %v688, 536870912
    %v690 = vshrl.u32 %v689, 30
    %v691 = vshll.u32 %v690, 30
    %v692 = vsub.s32 %v688, %v691
    %vm693 = vcmp.lt.s32.totalorder %v692, 0
    %v694 = vsub.s32 0, %v692
    %v695 = vsel %vm693, %v694, %v692
    %v696 = vclz %v695
    %v697 = vsub.s32 %v696, 2
    %vm698 = vcmp.gt.s32.totalorder 0, %v697
    %v699 = vsel %vm698, 0, %v697
    %v700 = vsub.s32 32, %v699
    %v701 = vshll.u32 %v692, %v699
    %v702 = vshrl.u32 %v684, %v700
    %v703 = vor.u32 %v701, %v702
    %v704 = vsub.s32 4294967266, %v699
    %v705 = vadd.s32 %v704, 127
    %v706 = vshll.u32 %v705, 23
    %v707 = vor.u32 4788187, %v706
    %v708 = vand.u32 2147483647, %v707
    %v710 = vcvt.s32.f32 %v703
    %v711 = vmul.f32 %v710, %v708
    %v712 = vxor.u32 %v711, 2147483648
    %v713 = vsel %vm630, %v712, %v711
    %v714 = vsub.s32 4, %v690
    %v715 = vsel %vm630, %v714, %v690
    %v716 = vsel %vm629, %v208, %v713
    %v717 = vsel %vm629, 0, %v715
    %v718 = vcosq.f32.pop %v716
    %v719 = vsinq.f32.pop %v716
    %vm720 = vweird.f32 %v208
    %v721 = vadd.s32 %v717, 3
    %v722 = vand.u32 %v721, 3
    %vm723 = vcmp.lt.s32.totalorder %v722, 2
    %vm724 = vcmp.eq.s32.totalorder %v722, 0
    %v725 = vxor.u32 %v719, 2147483648
    %v726 = vsel %vm724, %v718, %v725
    %vm727 = vcmp.eq.s32.totalorder %v722, 2
    %v728 = vxor.u32 %v718, 2147483648
    %v729 = vsel %vm727, %v728, %v719
    %v730 = vsel %vm723, %v726, %v729
    %v731 = vsel %vm720, nan, %v730
    %v732 = vand.u32 2147483647, %v209
    %vm733 = vcmp.le.f32.partialorder %v732, 0.7853982
    %vm734 = vcmp.lt.s32.totalorder %v209, 0
    %v735 = vand.u32 %v209, 2139095040
    %v736 = vshrl.u32 %v735, 23
    %v737 = vsub.s32 %v736, 127
    %v738 = vand.u32 2147483647, %v209
    %v739 = vand.u32 %v738, 8388607
    %v740 = vor.u32 %v739, 8388608
    %v741 = vsub.s32 0, %v740
    %v742 = vadd.s32 %v737, 1
    %vm743 = vcmp.gt.s32.totalorder %v742, 0
    %v744 = vsel %vm743, %v742, 0
    %v745 = vshrl.u32 %v744, 5
    %v746 = vand.u32 %v744, 31
    %v747 = vsub.s32 32, %v746
    %v748 = vshrl.u32 683565275, %v747
    %v749 = vshll.u32 683565275, %v746
    %v750 = vshrl.u32 2475754826, %v747
    %v751 = vor.u32 %v749, %v750
    %v752 = vshll.u32 2475754826, %v746
    %v753 = vshrl.u32 2131351028, %v747
    %v754 = vor.u32 %v752, %v753
    %v755 = vshll.u32 2131351028, %v746
    %v756 = vshrl.u32 2102212464, %v747
    %v757 = vor.u32 %v755, %v756
    %v758 = vshll.u32 2102212464, %v746
    %v759 = vshrl.u32 920167782, %v747
    %v760 = vor.u32 %v758, %v759
    %v761 = vshll.u32 920167782, %v746
    %v762 = vshrl.u32 1326507024, %v747
    %v763 = vor.u32 %v761, %v762
    %vm764 = vcmp.lt.s32.totalorder %v745, 1
    %vm765 = vcmp.lt.s32.totalorder %v745, 2
    %vm766 = vcmp.lt.s32.totalorder %v745, 3
    %vm767 = vcmp.lt.s32.totalorder %v745, 4
    %v768 = vsel %vm764, %v748, %v751
    %v769 = vsel %vm767, %v757, 2102212464
    %v770 = vsel %vm766, %v754, %v769
    %v771 = vsel %vm765, %v768, %v770
    %v772 = vsel %vm764, %v751, %v754
    %v773 = vsel %vm767, %v760, 920167782
    %v774 = vsel %vm766, %v757, %v773
    %v775 = vsel %vm765, %v772, %v774
    %v776 = vsel %vm764, %v754, %v757
    %v777 = vsel %vm767, %v763, 1326507024
    %v778 = vsel %vm766, %v760, %v777
    %v779 = vsel %vm765, %v776, %v778
    %v780 = vshll.u32 %v740, 8
    %v781 = vmul.u32.u64.compose %v780, %v779
    %v782 = vextract.low.u32 %v781
    %v783 = vextract.high.u32 %v781
    %v784 = vmul.u32.u64.compose %v780, %v775
    %v785 = vextract.low.u32 %v784
    %v786 = vextract.high.u32 %v784
    %v787 = vmul.u32 %v780, %v771
    %v788 = vadd.s32 %v783, %v785
    %vm789 = vc.u32 %v783, %v785
    %v790 = vadd.s32 %v786, 1
    %v791 = vsel %vm789, %v790, %v786
    %v792 = vadd.s32 %v787, %v791
    %v793 = vadd.s32 %v792, 536870912
    %v794 = vshrl.u32 %v793, 30
    %v795 = vshll.u32 %v794, 30
    %v796 = vsub.s32 %v792, %v795
    %vm797 = vcmp.lt.s32.totalorder %v796, 0
    %v798 = vsub.s32 0, %v796
    %v799 = vsel %vm797, %v798, %v796
    %v800 = vclz %v799
    %v801 = vsub.s32 %v800, 2
    %vm802 = vcmp.gt.s32.totalorder 0, %v801
    %v803 = vsel %vm802, 0, %v801
    %v804 = vsub.s32 32, %v803
    %v805 = vshll.u32 %v796, %v803
    %v806 = vshrl.u32 %v788, %v804
    %v807 = vor.u32 %v805, %v806
    %v808 = vsub.s32 4294967266, %v803
    %v809 = vadd.s32 %v808, 127
    %v810 = vshll.u32 %v809, 23
    %v811 = vor.u32 4788187, %v810
    %v812 = vand.u32 2147483647, %v811
    %v814 = vcvt.s32.f32 %v807
    %v815 = vmul.f32 %v814, %v812
    %v816 = vxor.u32 %v815, 2147483648
    %v817 = vsel %vm734, %v816, %v815
    %v818 = vsub.s32 4, %v794
    %v819 = vsel %vm734, %v818, %v794
    %v820 = vsel %vm733, %v209, %v817
    %v821 = vsel %vm733, 0, %v819
    %v822 = vcosq.f32.pop %v820
    %v823 = vsinq.f32.pop %v820
    %vm824 = vweird.f32 %v209
    %v825 = vadd.s32 %v821, 3
    %v826 = vand.u32 %v825, 3
    %vm827 = vcmp.lt.s32.totalorder %v826, 2
    %vm828 = vcmp.eq.s32.totalorder %v826, 0
    %v829 = vxor.u32 %v823, 2147483648
    %v830 = vsel %vm828, %v822, %v829
    %vm831 = vcmp.eq.s32.totalorder %v826, 2
    %v832 = vxor.u32 %v822, 2147483648
    %v833 = vsel %vm831, %v832, %v823
    %v834 = vsel %vm827, %v830, %v833
    %v835 = vsel %vm824, nan, %v834
    %v836 = vand.u32 2147483647, %v210
    %vm837 = vcmp.le.f32.partialorder %v836, 0.7853982
    %vm838 = vcmp.lt.s32.totalorder %v210, 0
    %v839 = vand.u32 %v210, 2139095040
    %v840 = vshrl.u32 %v839, 23
    %v841 = vsub.s32 %v840, 127
    %v842 = vand.u32 2147483647, %v210
    %v843 = vand.u32 %v842, 8388607
    %v844 = vor.u32 %v843, 8388608
    %v845 = vsub.s32 0, %v844
    %v846 = vadd.s32 %v841, 1
    %vm847 = vcmp.gt.s32.totalorder %v846, 0
    %v848 = vsel %vm847, %v846, 0
    %v849 = vshrl.u32 %v848, 5
    %v850 = vand.u32 %v848, 31
    %v851 = vsub.s32 32, %v850
    %v852 = vshrl.u32 683565275, %v851
    %v853 = vshll.u32 683565275, %v850
    %v854 = vshrl.u32 2475754826, %v851
    %v855 = vor.u32 %v853, %v854
    %v856 = vshll.u32 2475754826, %v850
    %v857 = vshrl.u32 2131351028, %v851
    %v858 = vor.u32 %v856, %v857
    %v859 = vshll.u32 2131351028, %v850
    %v860 = vshrl.u32 2102212464, %v851
    %v861 = vor.u32 %v859, %v860
    %v862 = vshll.u32 2102212464, %v850
    %v863 = vshrl.u32 920167782, %v851
    %v864 = vor.u32 %v862, %v863
    %v865 = vshll.u32 920167782, %v850
    %v866 = vshrl.u32 1326507024, %v851
    %v867 = vor.u32 %v865, %v866
    %vm868 = vcmp.lt.s32.totalorder %v849, 1
    %vm869 = vcmp.lt.s32.totalorder %v849, 2
    %vm870 = vcmp.lt.s32.totalorder %v849, 3
    %vm871 = vcmp.lt.s32.totalorder %v849, 4
    %v872 = vsel %vm868, %v852, %v855
    %v873 = vsel %vm871, %v861, 2102212464
    %v874 = vsel %vm870, %v858, %v873
    %v875 = vsel %vm869, %v872, %v874
    %v876 = vsel %vm868, %v855, %v858
    %v877 = vsel %vm871, %v864, 920167782
    %v878 = vsel %vm870, %v861, %v877
    %v879 = vsel %vm869, %v876, %v878
    %v880 = vsel %vm868, %v858, %v861
    %v881 = vsel %vm871, %v867, 1326507024
    %v882 = vsel %vm870, %v864, %v881
    %v883 = vsel %vm869, %v880, %v882
    %v884 = vshll.u32 %v844, 8
    %v885 = vmul.u32.u64.compose %v884, %v883
    %v886 = vextract.low.u32 %v885
    %v887 = vextract.high.u32 %v885
    %v888 = vmul.u32.u64.compose %v884, %v879
    %v889 = vextract.low.u32 %v888
    %v890 = vextract.high.u32 %v888
    %v891 = vmul.u32 %v884, %v875
    %v892 = vadd.s32 %v887, %v889
    %vm893 = vc.u32 %v887, %v889
    %v894 = vadd.s32 %v890, 1
    %v895 = vsel %vm893, %v894, %v890
    %v896 = vadd.s32 %v891, %v895
    %v897 = vadd.s32 %v896, 536870912
    %v898 = vshrl.u32 %v897, 30
    %v899 = vshll.u32 %v898, 30
    %v900 = vsub.s32 %v896, %v899
    %vm901 = vcmp.lt.s32.totalorder %v900, 0
    %v902 = vsub.s32 0, %v900
    %v903 = vsel %vm901, %v902, %v900
    %v904 = vclz %v903
    %v905 = vsub.s32 %v904, 2
    %vm906 = vcmp.gt.s32.totalorder 0, %v905
    %v907 = vsel %vm906, 0, %v905
    %v908 = vsub.s32 32, %v907
    %v909 = vshll.u32 %v900, %v907
    %v910 = vshrl.u32 %v892, %v908
    %v911 = vor.u32 %v909, %v910
    %v912 = vsub.s32 4294967266, %v907
    %v913 = vadd.s32 %v912, 127
    %v914 = vshll.u32 %v913, 23
    %v915 = vor.u32 4788187, %v914
    %v916 = vand.u32 2147483647, %v915
    %v918 = vcvt.s32.f32 %v911
    %v919 = vmul.f32 %v918, %v916
    %v920 = vxor.u32 %v919, 2147483648
    %v921 = vsel %vm838, %v920, %v919
    %v922 = vsub.s32 4, %v898
    %v923 = vsel %vm838, %v922, %v898
    %v924 = vsel %vm837, %v210, %v921
    %v925 = vsel %vm837, 0, %v923
    %v926 = vcosq.f32.pop %v924
    %v927 = vsinq.f32.pop %v924
    %vm928 = vweird.f32 %v210
    %v929 = vadd.s32 %v925, 3
    %v930 = vand.u32 %v929, 3
    %vm931 = vcmp.lt.s32.totalorder %v930, 2
    %vm932 = vcmp.eq.s32.totalorder %v930, 0
    %v933 = vxor.u32 %v927, 2147483648
    %v934 = vsel %vm932, %v926, %v933
    %vm935 = vcmp.eq.s32.totalorder %v930, 2
    %v936 = vxor.u32 %v926, 2147483648
    %v937 = vsel %vm935, %v936, %v927
    %v938 = vsel %vm931, %v934, %v937
    %v939 = vsel %vm928, nan, %v938
    %v940 = vand.u32 2147483647, %v211
    %vm941 = vcmp.le.f32.partialorder %v940, 0.7853982
    %vm942 = vcmp.lt.s32.totalorder %v211, 0
    %v943 = vand.u32 %v211, 2139095040
    %v944 = vshrl.u32 %v943, 23
    %v945 = vsub.s32 %v944, 127
    %v946 = vand.u32 2147483647, %v211
    %v947 = vand.u32 %v946, 8388607
    %v948 = vor.u32 %v947, 8388608
    %v949 = vsub.s32 0, %v948
    %v950 = vadd.s32 %v945, 1
    %vm951 = vcmp.gt.s32.totalorder %v950, 0
    %v952 = vsel %vm951, %v950, 0
    %v953 = vshrl.u32 %v952, 5
    %v954 = vand.u32 %v952, 31
    %v955 = vsub.s32 32, %v954
    %v956 = vshrl.u32 683565275, %v955
    %v957 = vshll.u32 683565275, %v954
    %v958 = vshrl.u32 2475754826, %v955
    %v959 = vor.u32 %v957, %v958
    %v960 = vshll.u32 2475754826, %v954
    %v961 = vshrl.u32 2131351028, %v955
    %v962 = vor.u32 %v960, %v961
    %v963 = vshll.u32 2131351028, %v954
    %v964 = vshrl.u32 2102212464, %v955
    %v965 = vor.u32 %v963, %v964
    %v966 = vshll.u32 2102212464, %v954
    %v967 = vshrl.u32 920167782, %v955
    %v968 = vor.u32 %v966, %v967
    %v969 = vshll.u32 920167782, %v954
    %v970 = vshrl.u32 1326507024, %v955
    %v971 = vor.u32 %v969, %v970
    %vm972 = vcmp.lt.s32.totalorder %v953, 1
    %vm973 = vcmp.lt.s32.totalorder %v953, 2
    %vm974 = vcmp.lt.s32.totalorder %v953, 3
    %vm975 = vcmp.lt.s32.totalorder %v953, 4
    %v976 = vsel %vm972, %v956, %v959
    %v977 = vsel %vm975, %v965, 2102212464
    %v978 = vsel %vm974, %v962, %v977
    %v979 = vsel %vm973, %v976, %v978
    %v980 = vsel %vm972, %v959, %v962
    %v981 = vsel %vm975, %v968, 920167782
    %v982 = vsel %vm974, %v965, %v981
    %v983 = vsel %vm973, %v980, %v982
    %v984 = vsel %vm972, %v962, %v965
    %v985 = vsel %vm975, %v971, 1326507024
    %v986 = vsel %vm974, %v968, %v985
    %v987 = vsel %vm973, %v984, %v986
    %v988 = vshll.u32 %v948, 8
    %v989 = vmul.u32.u64.compose %v988, %v987
    %v990 = vextract.low.u32 %v989
    %v991 = vextract.high.u32 %v989
    %v992 = vmul.u32.u64.compose %v988, %v983
    %v993 = vextract.low.u32 %v992
    %v994 = vextract.high.u32 %v992
    %v995 = vmul.u32 %v988, %v979
    %v996 = vadd.s32 %v991, %v993
    %vm997 = vc.u32 %v991, %v993
    %v998 = vadd.s32 %v994, 1
    %v999 = vsel %vm997, %v998, %v994
    %v1000 = vadd.s32 %v995, %v999
    %v1001 = vadd.s32 %v1000, 536870912
    %v1002 = vshrl.u32 %v1001, 30
    %v1003 = vshll.u32 %v1002, 30
    %v1004 = vsub.s32 %v1000, %v1003
    %vm1005 = vcmp.lt.s32.totalorder %v1004, 0
    %v1006 = vsub.s32 0, %v1004
    %v1007 = vsel %vm1005, %v1006, %v1004
    %v1008 = vclz %v1007
    %v1009 = vsub.s32 %v1008, 2
    %vm1010 = vcmp.gt.s32.totalorder 0, %v1009
    %v1011 = vsel %vm1010, 0, %v1009
    %v1012 = vsub.s32 32, %v1011
    %v1013 = vshll.u32 %v1004, %v1011
    %v1014 = vshrl.u32 %v996, %v1012
    %v1015 = vor.u32 %v1013, %v1014
    %v1016 = vsub.s32 4294967266, %v1011
    %v1017 = vadd.s32 %v1016, 127
    %v1018 = vshll.u32 %v1017, 23
    %v1019 = vor.u32 4788187, %v1018
    %v1020 = vand.u32 2147483647, %v1019
    %v1022 = vcvt.s32.f32 %v1015
    %v1023 = vmul.f32 %v1022, %v1020
    %v1024 = vxor.u32 %v1023, 2147483648
    %v1025 = vsel %vm942, %v1024, %v1023
    %v1026 = vsub.s32 4, %v1002
    %v1027 = vsel %vm942, %v1026, %v1002
    %v1028 = vsel %vm941, %v211, %v1025
    %v1029 = vsel %vm941, 0, %v1027
    %v1030 = vcosq.f32.pop %v1028
    %v1031 = vsinq.f32.pop %v1028
    %vm1032 = vweird.f32 %v211
    %v1033 = vadd.s32 %v1029, 3
    %v1034 = vand.u32 %v1033, 3
    %vm1035 = vcmp.lt.s32.totalorder %v1034, 2
    %vm1036 = vcmp.eq.s32.totalorder %v1034, 0
    %v1037 = vxor.u32 %v1031, 2147483648
    %v1038 = vsel %vm1036, %v1030, %v1037
    %vm1039 = vcmp.eq.s32.totalorder %v1034, 2
    %v1040 = vxor.u32 %v1030, 2147483648
    %v1041 = vsel %vm1039, %v1040, %v1031
    %v1042 = vsel %vm1035, %v1038, %v1041
    %v1043 = vsel %vm1032, nan, %v1042
    %1044 = vset.pattern.permute.xlu0 2
    %1045 = vperm.xlu0 %1044, %v103
    %v1046 = vpop.permute.xlu0 %1045
    %1048 = vset.pattern.permute.xlu0 2
    %1049 = vperm.xlu0 %1048, %v107
    %v1050 = vpop.permute.xlu0 %1049
    %1052 = vset.pattern.permute.xlu0 2
    %1053 = vperm.xlu0 %1052, %v111
    %v1054 = vpop.permute.xlu0 %1053
    %1056 = vset.pattern.permute.xlu0 2
    %1057 = vperm.xlu0 %1056, %v115
    %v1058 = vpop.permute.xlu0 %1057
    %1060 = vset.pattern.permute.xlu0 2
    %1061 = vperm.xlu0 %1060, %v119
    %v1062 = vpop.permute.xlu0 %1061
    %1064 = vset.pattern.permute.xlu0 2
    %1065 = vperm.xlu0 %1064, %v123
    %v1066 = vpop.permute.xlu0 %1065
    %1068 = vset.pattern.permute.xlu0 2
    %1069 = vperm.xlu0 %1068, %v127
    %v1070 = vpop.permute.xlu0 %1069
    %1072 = vset.pattern.permute.xlu0 2
    %1073 = vperm.xlu0 %1072, %v131
    %v1074 = vpop.permute.xlu0 %1073
    %v1076 = vsub.f32 %v315, %v1046
    %v1077 = vsub.f32 %v419, %v1050
    %v1078 = vsub.f32 %v523, %v1054
    %v1079 = vsub.f32 %v627, %v1058
    %v1080 = vsub.f32 %v731, %v1062
    %v1081 = vsub.f32 %v835, %v1066
    %v1082 = vsub.f32 %v939, %v1070
    %v1083 = vsub.f32 %v1043, %v1074
    %v1084 = vmul.f32 %v1076, 1.442695
    %v1085 = vpow.pop %v1084
    %v1086 = vmul.f32 %v1077, 1.442695
    %v1087 = vpow.pop %v1086
    %v1088 = vmul.f32 %v1078, 1.442695
    %v1089 = vpow.pop %v1088
    %v1090 = vmul.f32 %v1079, 1.442695
    %v1091 = vpow.pop %v1090
    %v1092 = vmul.f32 %v1080, 1.442695
    %v1093 = vpow.pop %v1092
    %v1094 = vmul.f32 %v1081, 1.442695
    %v1095 = vpow.pop %v1094
    %v1096 = vmul.f32 %v1082, 1.442695
    %v1097 = vpow.pop %v1096
    %v1098 = vmul.f32 %v1083, 1.442695
    %v1099 = vpow.pop %v1098
    %v1100 = vadd.f32 %v1085, 1.0
    %v1101 = vlog2.pop %v1100
    %v1102 = vmul.f32 %v1101, 0.6931472
    %v1103 = vmul.f32 -0.5, %v1085
    %v1104 = vadd.f32 %v1103, 1.0
    %v1105 = vmul.f32 %v1104, %v1085
    %v1106 = vand.u32 2147483647, %v1085
    %vm1107 = vcmp.lt.f32.partialorder %v1106, 0.0004427343
    %v1108 = vsel %vm1107, %v1105, %v1102
    %v1109 = vadd.f32 %v1087, 1.0
    %v1110 = vlog2.pop %v1109
    %v1111 = vmul.f32 %v1110, 0.6931472
    %v1112 = vmul.f32 -0.5, %v1087
    %v1113 = vadd.f32 %v1112, 1.0
    %v1114 = vmul.f32 %v1113, %v1087
    %v1115 = vand.u32 2147483647, %v1087
    %vm1116 = vcmp.lt.f32.partialorder %v1115, 0.0004427343
    %v1117 = vsel %vm1116, %v1114, %v1111
    %v1118 = vadd.f32 %v1089, 1.0
    %v1119 = vlog2.pop %v1118
    %v1120 = vmul.f32 %v1119, 0.6931472
    %v1121 = vmul.f32 -0.5, %v1089
    %v1122 = vadd.f32 %v1121, 1.0
    %v1123 = vmul.f32 %v1122, %v1089
    %v1124 = vand.u32 2147483647, %v1089
    %vm1125 = vcmp.lt.f32.partialorder %v1124, 0.0004427343
    %v1126 = vsel %vm1125, %v1123, %v1120
    %v1127 = vadd.f32 %v1091, 1.0
    %v1128 = vlog2.pop %v1127
    %v1129 = vmul.f32 %v1128, 0.6931472
    %v1130 = vmul.f32 -0.5, %v1091
    %v1131 = vadd.f32 %v1130, 1.0
    %v1132 = vmul.f32 %v1131, %v1091
    %v1133 = vand.u32 2147483647, %v1091
    %vm1134 = vcmp.lt.f32.partialorder %v1133, 0.0004427343
    %v1135 = vsel %vm1134, %v1132, %v1129
    %v1136 = vadd.f32 %v1093, 1.0
    %v1137 = vlog2.pop %v1136
    %v1138 = vmul.f32 %v1137, 0.6931472
    %v1139 = vmul.f32 -0.5, %v1093
    %v1140 = vadd.f32 %v1139, 1.0
    %v1141 = vmul.f32 %v1140, %v1093
    %v1142 = vand.u32 2147483647, %v1093
    %vm1143 = vcmp.lt.f32.partialorder %v1142, 0.0004427343
    %v1144 = vsel %vm1143, %v1141, %v1138
    %v1145 = vadd.f32 %v1095, 1.0
    %v1146 = vlog2.pop %v1145
    %v1147 = vmul.f32 %v1146, 0.6931472
    %v1148 = vmul.f32 -0.5, %v1095
    %v1149 = vadd.f32 %v1148, 1.0
    %v1150 = vmul.f32 %v1149, %v1095
    %v1151 = vand.u32 2147483647, %v1095
    %vm1152 = vcmp.lt.f32.partialorder %v1151, 0.0004427343
    %v1153 = vsel %vm1152, %v1150, %v1147
    %v1154 = vadd.f32 %v1097, 1.0
    %v1155 = vlog2.pop %v1154
    %v1156 = vmul.f32 %v1155, 0.6931472
    %v1157 = vmul.f32 -0.5, %v1097
    %v1158 = vadd.f32 %v1157, 1.0
    %v1159 = vmul.f32 %v1158, %v1097
    %v1160 = vand.u32 2147483647, %v1097
    %vm1161 = vcmp.lt.f32.partialorder %v1160, 0.0004427343
    %v1162 = vsel %vm1161, %v1159, %v1156
    %v1163 = vadd.f32 %v1099, 1.0
    %v1164 = vlog2.pop %v1163
    %v1165 = vmul.f32 %v1164, 0.6931472
    %v1166 = vmul.f32 -0.5, %v1099
    %v1167 = vadd.f32 %v1166, 1.0
    %v1168 = vmul.f32 %v1167, %v1099
    %v1169 = vand.u32 2147483647, %v1099
    %vm1170 = vcmp.lt.f32.partialorder %v1169, 0.0004427343
    %v1171 = vsel %vm1170, %v1168, %v1165
    %v1172 = vld [vmem:[#allocation2] sm:$0x3]
    %v1173 = vld [vmem:[#allocation2 + $0x2] sm:$0x3]
    %v1174 = vld [vmem:[#allocation2 + $0x4] sm:$0x3]
    %v1175 = vld [vmem:[#allocation2 + $0x6] sm:$0x3]
    %v1176 = vld [vmem:[#allocation2 + $0x8] sm:$0x3]
    %v1177 = vld [vmem:[#allocation2 + $0xa] sm:$0x3]
    %v1178 = vld [vmem:[#allocation2 + $0xc] sm:$0x3]
    %v1179 = vld [vmem:[#allocation2 + $0xe] sm:$0x3]
    %v1180 = vadd.f32 %v1172, %v1108
    %v1181 = vadd.f32 %v1173, %v1117
    %v1182 = vadd.f32 %v1174, %v1126
    %v1183 = vadd.f32 %v1175, %v1135
    %v1184 = vadd.f32 %v1176, %v1144
    %v1185 = vadd.f32 %v1177, %v1153
    %v1186 = vadd.f32 %v1178, %v1162
    %v1187 = vadd.f32 %v1179, %v1171
    %1188 = vst [vmem:[#allocation2] sm:$0x3] %v1180
    %1189 = vst [vmem:[#allocation2 + $0x2] sm:$0x3] %v1181
    %1190 = vst [vmem:[#allocation2 + $0x4] sm:$0x3] %v1182
    %1191 = vst [vmem:[#allocation2 + $0x6] sm:$0x3] %v1183
    %1192 = vst [vmem:[#allocation2 + $0x8] sm:$0x3] %v1184
    %1193 = vst [vmem:[#allocation2 + $0xa] sm:$0x3] %v1185
    %1194 = vst [vmem:[#allocation2 + $0xc] sm:$0x3] %v1186
    %1195 = vst [vmem:[#allocation2 + $0xe] sm:$0x3] %v1187
    // Predicated region
    $region14: #{curve_size_loss.1} parent=1 // pred_check
      %p1196 = pneg %p29
    $region15: #{curve_size_loss.1} parent=1 // pred_check_branch
      %1198 = sbr.rel (%p1196) target = $region17
    $region16: #{curve_size_loss.1} parent=1 // pred_region
      %v1199 = vld [vmem:[#allocation2] sm:$0x3]
      %v1200 = vld [vmem:[#allocation2 + $0x2] sm:$0x3]
      %v1201 = vld [vmem:[#allocation2 + $0x4] sm:$0x3]
      %v1202 = vld [vmem:[#allocation2 + $0x6] sm:$0x3]
      %v1203 = vld [vmem:[#allocation2 + $0x8] sm:$0x3]
      %v1204 = vld [vmem:[#allocation2 + $0xa] sm:$0x3]
      %v1205 = vld [vmem:[#allocation2 + $0xc] sm:$0x3]
      %v1206 = vld [vmem:[#allocation2 + $0xe] sm:$0x3]
      %vm1207 = vcmask 1041408
      %v1208 = vsel %vm1207, %v1199, 0.0
      %v1209 = vsel %vm1207, %v1200, 0.0
      %v1210 = vadd.f32 %v1208, %v1209
      %v1211 = vsel %vm1207, %v1201, 0.0
      %v1212 = vadd.f32 %v1210, %v1211
      %v1213 = vsel %vm1207, %v1202, 0.0
      %v1214 = vadd.f32 %v1212, %v1213
      %v1215 = vsel %vm1207, %v1203, 0.0
      %v1216 = vadd.f32 %v1214, %v1215
      %v1217 = vsel %vm1207, %v1204, 0.0
      %v1218 = vadd.f32 %v1216, %v1217
      %v1219 = vsel %vm1207, %v1205, 0.0
      %v1220 = vadd.f32 %v1218, %v1219
      %v1221 = vsel %vm1207, %v1206, 0.0
      %v1222 = vadd.f32 %v1220, %v1221
      %1223 = vadd.xlane.f32.xlu0 %v1222
      %v1224 = vpop.xlane.xlu0 %1223
      %v1225 = vrot.slane %v1224, 4
      %v1226 = vadd.f32 %v1224, %v1225
      %v1227 = vrot.slane %v1226, 2
      %v1228 = vadd.f32 %v1226, %v1227
      %v1229 = vrot.slane %v1228, 1
      %v1230 = vadd.f32 %v1228, %v1229
      %s1231 = vtos %v1230
      %v1232 = vstv %s1231
      %vm1233 = vcmask 0
      %1234 = vst.msk [vmem:[#allocation3] sm:$0x1] %vm1233, %v1232
    $region17: #{curve_size_loss.1} parent=1 // pred_fallthru
      _
    // Predicated region
    $region18: #{curve_size_loss.1} parent=1 // pred_check
      _
    $region19: #{curve_size_loss.1} parent=1 // pred_check_branch
      %1236 = sbr.rel (0) target = $region21
    $region20: #{curve_size_loss.1} parent=1 // pred_region
      %s1238 = ssub.s32 16, 16
      %1239 = vsyncadd [#allocation4], %s1238
      %s1241 = sshll.u32 [#allocation3], 4
      %s1242 = int_to_ptr.vmem [resolvable:$true] %s1241
      %1244 = dma.vmem_to_hbm [thread:$0]  %s1242, 16, %s2, [#allocation4]
    $region21: #{curve_size_loss.1} parent=1 // pred_fallthru
      _
    // Predicated region
    $region22: #{curve_size_loss.1} parent=1 // pred_check
      _
    $region23: #{curve_size_loss.1} parent=1 // pred_check_branch
      %1246 = sbr.rel (0) target = $region25
    $region24: #{curve_size_loss.1} parent=1 // pred_region
      %1247 = dma.done [#allocation4], 16
    $region25: #{curve_size_loss.1} parent=1 // pred_fallthru
      _
    %1248 = vsyncpa [#allocation4], 1

</llo_original>
